<compile_context>
chip_gen: v6e
topology: v6e:2x2x1
jax: 0.10.0
libtpu: 0.0.40
codegen_flags: <defaults>
</compile_context>

<pallas_src>
import functools

import jax
import jax.numpy as jnp
from jax.experimental import pallas as pl
from jax.experimental.pallas import tpu as pltpu


HIDDEN = 50           # h = 50, fixed in the PyTorch module's __init__
_LANE = 128
_SUBLANE = 8
_NEG_INF = -1e30      # pad-logit bias: exp(pad) == 0, alpha/precision unchanged


def _round_up(x, m):
    return (x + m - 1) // m * m


def _prior_dirichlet_kernel(x_ref, w1_ref, b1_ref, w2_ref, b2_ref,
                            alpha_ref, prec_ref, *, compute_dtype):
    # fc1 + ReLU (MXU matmul, VPU max).  compute_dtype=bf16 halves MXU passes
    # on v6e/v7x; accumulation stays f32 via preferred_element_type.
    x = x_ref[...].astype(compute_dtype)
    w1 = w1_ref[...].astype(compute_dtype)
    h = jnp.dot(x, w1, preferred_element_type=jnp.float32) + b1_ref[...]
    h = jnp.maximum(h, 0.0)

    # fc2 -> logits (padded lanes carry -1e30 from the padded bias).
    w2 = w2_ref[...].astype(compute_dtype)
    logits = jnp.dot(h.astype(compute_dtype), w2,
                     preferred_element_type=jnp.float32) + b2_ref[...]

    # alpha = exp(logits) exactly (pad lanes: exp(-1e30) == 0, no NaN pads).
    alpha = jnp.exp(logits)
    alpha_ref[...] = alpha
    # Compact precision: one masked lane-0 store per row group instead of a
    # 128-lane broadcast store.
    prec_ref[...] = jnp.sum(alpha, axis=1, keepdims=True)


def pad_params(w1, b1, w2, b2):
    """One-time prep (call at init, NOT per forward): pad weights/biases to
    (8,128)-friendly shapes.  Zero pads are exact through fc1/ReLU; padded fc2
    bias of -1e30 makes exp(pad logit) == 0 so alpha/precision are unchanged."""
    w1 = jnp.asarray(w1, jnp.float32)
    b1 = jnp.asarray(b1, jnp.float32)
    w2 = jnp.asarray(w2, jnp.float32)
    b2 = jnp.asarray(b2, jnp.float32)
    D, H = w1.shape
    C = w2.shape[1]
    H_pad = _round_up(H, 64)        # 50 -> 64
    C_pad = _round_up(C, _LANE)     # 10 -> 128 (lane-dense alpha stores)

    w1p = jnp.zeros((D, H_pad), jnp.float32).at[:, :H].set(w1)
    b1p = jnp.zeros((1, H_pad), jnp.float32).at[:, :H].set(b1.reshape(1, H))
    w2p = jnp.zeros((H_pad, C_pad), jnp.float32).at[:H, :C].set(w2)
    b2p = jnp.full((1, C_pad), _NEG_INF, jnp.float32).at[:, :C].set(b2.reshape(1, C))
    return (w1p, b1p, w2p, b2p), C


@functools.partial(jax.jit,
                   static_argnames=("output_dim", "b_tile_max", "use_bf16_matmul"))
def prior_dirichlet_forward(x, padded_params, *, output_dim,
                            b_tile_max=1024, use_bf16_matmul=False):
    """x: (B, input_dim) f32.  Returns (mean (B,C), alpha (B,C), precision (B,))."""
    x = jnp.asarray(x, jnp.float32)
    w1p, b1p, w2p, b2p = padded_params
    B, D = x.shape
    H_pad = w1p.shape[1]
    C_pad = w2p.shape[1]

    # --- B tiling: ragged last tile is masked by Pallas (no pad copy of x).
    # Aim for >= 4 grid steps so v7x's two TensorCores both get work; cap at
    # b_tile_max (VMEM footprint stays a few MiB on every generation).
    b_tile = max(_SUBLANE,
                 min(int(b_tile_max), _round_up(pl.cdiv(B, 4), _SUBLANE)))
    grid = (pl.cdiv(B, b_tile),)

    compute_dtype = jnp.bfloat16 if use_bf16_matmul else jnp.float32
    kernel = functools.partial(_prior_dirichlet_kernel,
                               compute_dtype=compute_dtype)

    row_spec = lambda i: (i, 0)
    fixed_spec = lambda i: (0, 0)

    cost = pl.CostEstimate(
        flops=2 * B * (D * H_pad + H_pad * C_pad),
        transcendentals=B * C_pad,
        bytes_accessed=4 * (B * D + D * H_pad + H_pad * C_pad
                            + B * C_pad + B),
    )

    alpha_p, prec_p = pl.pallas_call(
        kernel,
        out_shape=(jax.ShapeDtypeStruct((B, C_pad), jnp.float32),
                   jax.ShapeDtypeStruct((B, 1), jnp.float32)),
        grid_spec=pltpu.PrefetchScalarGridSpec(
            num_scalar_prefetch=0,
            grid=grid,
            in_specs=[
                pl.BlockSpec((b_tile, D), row_spec),
                pl.BlockSpec((D, H_pad), fixed_spec),
                pl.BlockSpec((1, H_pad), fixed_spec),
                pl.BlockSpec((H_pad, C_pad), fixed_spec),
                pl.BlockSpec((1, C_pad), fixed_spec),
            ],
            out_specs=(
                pl.BlockSpec((b_tile, C_pad), row_spec),
                pl.BlockSpec((b_tile, 1), row_spec),
            ),
        ),
        compiler_params=pltpu.CompilerParams(
            dimension_semantics=("parallel",)),
        cost_estimate=cost,
    )(x, w1p, b1p, w2p, b2p)

    alpha = alpha_p[:, :output_dim]
    precision = prec_p[:, 0]
    # mean = softmax(logits) = alpha / sum(alpha): derived OUTSIDE the kernel
    # from alpha (exact division, no approx reciprocal) so the kernel writes
    # one fewer padded output.
    mean = alpha / precision[:, None]
    return mean, alpha, precision


def init_params(key, input_dim, output_dim):
    """Deterministic PyTorch-default-style init: U(-1/sqrt(fan_in), 1/sqrt(fan_in))."""
    k1, k2, k3, k4 = jax.random.split(key, 4)
    bound1 = 1.0 / jnp.sqrt(jnp.float32(input_dim))
    bound2 = 1.0 / jnp.sqrt(jnp.float32(HIDDEN))
    w1 = jax.random.uniform(k1, (input_dim, HIDDEN), jnp.float32, -bound1, bound1)
    b1 = jax.random.uniform(k2, (HIDDEN,), jnp.float32, -bound1, bound1)
    w2 = jax.random.uniform(k3, (HIDDEN, output_dim), jnp.float32, -bound2, bound2)
    b2 = jax.random.uniform(k4, (output_dim,), jnp.float32, -bound2, bound2)
    return w1, b1, w2, b2


def _reference(x, w1, b1, w2, b2):
    h = jnp.maximum(x @ w1 + b1, 0.0)
    logits = h @ w2 + b2
    alpha = jnp.exp(logits)
    return jax.nn.softmax(logits, axis=1), alpha, jnp.sum(alpha, axis=1)


if __name__ == "__main__":
    B, INPUT_DIM, OUTPUT_DIM = 8, 32, 10
    # a0 / eps / eps_var only affect kl_loss, not forward.
    # TODO(synk): kl_loss needs lgamma/digamma (torch.lgamma/digamma); no Pallas TPU lowering, so only forward is kernelized.

    key = jax.random.PRNGKey(0)
    kx, kp = jax.random.split(key)
    x = jax.random.normal(kx, (B, INPUT_DIM), jnp.float32)
    w1, b1, w2, b2 = init_params(kp, INPUT_DIM, OUTPUT_DIM)

    # Pad parameters ONCE at init (hoisted out of the hot forward path).
    padded_params, out_dim = pad_params(w1, b1, w2, b2)

    mean, alpha, precision = prior_dirichlet_forward(x, padded_params,
                                                     output_dim=out_dim)
    jax.block_until_ready((mean, alpha, precision))

    mean_ref, alpha_ref, prec_ref = _reference(x, w1, b1, w2, b2)
    assert mean.shape == (B, OUTPUT_DIM) and alpha.shape == (B, OUTPUT_DIM)
    assert precision.shape == (B,)
    assert jnp.allclose(mean, mean_ref, atol=1e-5, rtol=1e-4)
    assert jnp.allclose(alpha, alpha_ref, atol=1e-5, rtol=1e-4)
    assert jnp.allclose(precision, prec_ref, atol=1e-4, rtol=1e-4)

    # Ragged multi-step grid path: B=1037, b_tile=264, grid=(4,), masked last
    # tile — no rounding of B to a tile multiple and no pad copy of x.
    B2 = 1037
    x2 = jax.random.normal(jax.random.PRNGKey(1), (B2, INPUT_DIM), jnp.float32)
    mean2, alpha2, prec2 = prior_dirichlet_forward(x2, padded_params,
                                                   output_dim=out_dim)
    jax.block_until_ready((mean2, alpha2, prec2))
    mean2_ref, alpha2_ref, prec2_ref = _reference(x2, w1, b1, w2, b2)
    assert mean2.shape == (B2, OUTPUT_DIM) and prec2.shape == (B2,)
    assert jnp.allclose(mean2, mean2_ref, atol=1e-5, rtol=1e-4)
    assert jnp.allclose(alpha2, alpha2_ref, atol=1e-5, rtol=1e-4)
    assert jnp.allclose(prec2, prec2_ref, atol=1e-4, rtol=1e-4)

    # Optional bf16-operand matmul path (v6e/v7x MXU-native); loose tolerance.
    mean3, alpha3, prec3 = prior_dirichlet_forward(
        x2, padded_params, output_dim=out_dim, use_bf16_matmul=True)
    jax.block_until_ready((mean3, alpha3, prec3))
    assert jnp.allclose(mean3, mean2_ref, rtol=5e-2, atol=1e-2)
    assert jnp.allclose(alpha3, alpha2_ref, rtol=5e-2, atol=5e-2)
    assert jnp.allclose(prec3, prec2_ref, rtol=5e-2, atol=5e-2)

    print("KERNEL_OK")
</pallas_src>

<mosaic_0001>
module attributes {stable_mosaic.version = 11 : i64} {
  func.func @_prior_dirichlet_kernel(%arg0: i32, %arg1: memref<8x32xf32, #tpu.memory_space<vmem>>, %arg2: memref<32x64xf32, #tpu.memory_space<vmem>>, %arg3: memref<1x64xf32, #tpu.memory_space<vmem>>, %arg4: memref<64x128xf32, #tpu.memory_space<vmem>>, %arg5: memref<1x128xf32, #tpu.memory_space<vmem>>, %arg6: memref<8x128xf32, #tpu.memory_space<vmem>>, %arg7: memref<8x1xf32, #tpu.memory_space<vmem>>) attributes {dimension_semantics = [#tpu.dimension_semantics<parallel>], iteration_bounds = array<i64: 1>, scalar_prefetch = 0 : i64, scratch_operands = 0 : i64, tpu.core_type = #tpu.core_type<tc>, window_params = [{transform_indices = @transform_0, window_bounds = array<i64: 8, 32>}, {pipeline_mode = #tpu.pipeline_mode<synchronous>, transform_indices = @transform_1, window_bounds = array<i64: 32, 64>}, {pipeline_mode = #tpu.pipeline_mode<synchronous>, transform_indices = @transform_2, window_bounds = array<i64: 1, 64>}, {pipeline_mode = #tpu.pipeline_mode<synchronous>, transform_indices = @transform_3, window_bounds = array<i64: 64, 128>}, {pipeline_mode = #tpu.pipeline_mode<synchronous>, transform_indices = @transform_4, window_bounds = array<i64: 1, 128>}, {transform_indices = @transform_5, window_bounds = array<i64: 8, 128>}, {transform_indices = @transform_6, window_bounds = array<i64: 8, 1>}]} {
    %c0 = arith.constant 0 : index
    %c0_0 = arith.constant 0 : index
    %0 = vector.load %arg1[%c0, %c0_0] : memref<8x32xf32, #tpu.memory_space<vmem>>, vector<8x32xf32>
    %c0_1 = arith.constant 0 : index
    %c0_2 = arith.constant 0 : index
    %1 = vector.load %arg2[%c0_1, %c0_2] : memref<32x64xf32, #tpu.memory_space<vmem>>, vector<32x64xf32>
    %cst = arith.constant dense<0.000000e+00> : vector<8x64xf32>
    %2 = tpu.matmul %0, %1, %cst {dimension_numbers = #tpu.dot_dimension_numbers<[1], [0], [0], [1], [0, 0, 1, 1], [], []>} : vector<8x32xf32>, vector<32x64xf32>, vector<8x64xf32> -> vector<8x64xf32>
    %c0_3 = arith.constant 0 : index
    %c0_4 = arith.constant 0 : index
    %3 = vector.load %arg3[%c0_3, %c0_4] : memref<1x64xf32, #tpu.memory_space<vmem>>, vector<1x64xf32>
    %4 = vector.broadcast %3 : vector<1x64xf32> to vector<8x64xf32>
    %5 = arith.addf %2, %4 : vector<8x64xf32>
    %cst_5 = arith.constant 0.000000e+00 : f32
    %6 = vector.broadcast %cst_5 : f32 to vector<8x64xf32>
    %7 = arith.maximumf %5, %6 : vector<8x64xf32>
    %c0_6 = arith.constant 0 : index
    %c0_7 = arith.constant 0 : index
    %8 = vector.load %arg4[%c0_6, %c0_7] : memref<64x128xf32, #tpu.memory_space<vmem>>, vector<64x128xf32>
    %cst_8 = arith.constant dense<0.000000e+00> : vector<8x128xf32>
    %9 = tpu.matmul %7, %8, %cst_8 {dimension_numbers = #tpu.dot_dimension_numbers<[1], [0], [0], [1], [0, 0, 1, 1], [], []>} : vector<8x64xf32>, vector<64x128xf32>, vector<8x128xf32> -> vector<8x128xf32>
    %c0_9 = arith.constant 0 : index
    %c0_10 = arith.constant 0 : index
    %10 = vector.load %arg5[%c0_9, %c0_10] : memref<1x128xf32, #tpu.memory_space<vmem>>, vector<1x128xf32>
    %11 = vector.broadcast %10 : vector<1x128xf32> to vector<8x128xf32>
    %12 = arith.addf %9, %11 : vector<8x128xf32>
    %13 = math.exp %12 : vector<8x128xf32>
    %c0_11 = arith.constant 0 : index
    %c0_12 = arith.constant 0 : index
    %14 = vector.load %arg6[%c0_11, %c0_12] : memref<8x128xf32, #tpu.memory_space<vmem>>, vector<8x128xf32>
    tpu.vector_store %arg6[%c0_11, %c0_12], %13 {strides = array<i32>} : memref<8x128xf32, #tpu.memory_space<vmem>>, vector<8x128xf32>,
    %cst_13 = arith.constant dense<0.000000e+00> : vector<8xf32>
    %15 = vector.multi_reduction <add>, %13, %cst_13 [1] : vector<8x128xf32> to vector<8xf32>
    %16 = vector.shape_cast %15 : vector<8xf32> to vector<8x1xf32>
    %c0_14 = arith.constant 0 : index
    %c0_15 = arith.constant 0 : index
    %17 = vector.load %arg7[%c0_14, %c0_15] : memref<8x1xf32, #tpu.memory_space<vmem>>, vector<8x1xf32>
    tpu.vector_store %arg7[%c0_14, %c0_15], %16 {strides = array<i32>} : memref<8x1xf32, #tpu.memory_space<vmem>>, vector<8x1xf32>,
    return
  }
  func.func @transform_0(%arg0: i32) -> (i32, i32) {
    %c0_i32 = arith.constant 0 : i32
    %c0_i32_0 = arith.constant 0 : i32
    return %arg0, %c0_i32 : i32, i32
  }
  func.func @transform_1(%arg0: i32) -> (i32, i32) {
    %c0_i32 = arith.constant 0 : i32
    %c0_i32_0 = arith.constant 0 : i32
    %c0_i32_1 = arith.constant 0 : i32
    return %c0_i32, %c0_i32_0 : i32, i32
  }
  func.func @transform_2(%arg0: i32) -> (i32, i32) {
    %c0_i32 = arith.constant 0 : i32
    %c0_i32_0 = arith.constant 0 : i32
    %c0_i32_1 = arith.constant 0 : i32
    return %c0_i32, %c0_i32_0 : i32, i32
  }
  func.func @transform_3(%arg0: i32) -> (i32, i32) {
    %c0_i32 = arith.constant 0 : i32
    %c0_i32_0 = arith.constant 0 : i32
    %c0_i32_1 = arith.constant 0 : i32
    return %c0_i32, %c0_i32_0 : i32, i32
  }
  func.func @transform_4(%arg0: i32) -> (i32, i32) {
    %c0_i32 = arith.constant 0 : i32
    %c0_i32_0 = arith.constant 0 : i32
    %c0_i32_1 = arith.constant 0 : i32
    return %c0_i32, %c0_i32_0 : i32, i32
  }
  func.func @transform_5(%arg0: i32) -> (i32, i32) {
    %c0_i32 = arith.constant 0 : i32
    %c0_i32_0 = arith.constant 0 : i32
    return %arg0, %c0_i32 : i32, i32
  }
  func.func @transform_6(%arg0: i32) -> (i32, i32) {
    %c0_i32 = arith.constant 0 : i32
    %c0_i32_0 = arith.constant 0 : i32
    return %arg0, %c0_i32 : i32, i32
  }
}

</mosaic_0001>

<llo_original>
// kernel: prior_dirichlet_forward.1
$region0: #{prior_dirichlet_forward.1}
  #allocation0 [shape = 'u32[]', space=smem, size = 0x4, offset = 0x4, fixed_abs, tag = 'smem constant byte address 0x4 - core index']
  #allocation1 [shape = 'u32[144,128]{1,0:T(1,128)}', space=vmem, size = 0x12000, scoped, tag = 'internal scratch']
  %s0 = inlined_call_operand.hbm [shape: f32[8,32], index: 0, kind: input, shape index: {}]
  %s1 = inlined_call_operand.hbm [shape: f32[32,64], index: 1, kind: input, shape index: {}]
  %s2 = inlined_call_operand.vmem [shape: f32[1,64], index: 2, kind: input, shape index: {}]
  %s3 = inlined_call_operand.hbm [shape: f32[64,128], index: 3, kind: input, shape index: {}]
  %s4 = inlined_call_operand.vmem [shape: f32[1,128], index: 4, kind: input, shape index: {}]
  %s5 = inlined_call_operand.vmem [shape: f32[8,128], index: 5, kind: output, shape index: {0}]
  %s6 = inlined_call_operand.vmem [shape: f32[8,1], index: 6, kind: output, shape index: {1}]
  %7 = xla_tuple %s5, %s6
  %s8 = sld [smem:[#allocation0]]
  $region50: #{prior_dirichlet_forward.1} parent=0
    _
  %s10 = ssub.s32 1, %s8
  %s11 = scalar_select 0, %s10, %s8
  $region1: #{prior_dirichlet_forward.1} parent=0
    #allocation2 [shape = 'u8[4096]{0}', space=vmem, size = 0x1000, scoped, tag = 'input window, operand 0, single buffered']
    #allocation3 [shape = 's32[1]{0}', space=sflag, size = 0x4, scoped, tag = 'scoped memory for prior_dirichlet_forward.1']
    #allocation4 [shape = 'u8[16384]{0}', space=vmem, size = 0x4000, scoped, tag = 'input window, operand 1, single buffered']
    #allocation5 [shape = 's32[1]{0}', space=sflag, size = 0x4, scoped, tag = 'scoped memory for prior_dirichlet_forward.1']
    #allocation6 [shape = 'u8[32768]{0}', space=vmem, size = 0x8000, scoped, tag = 'input window, operand 3, single buffered']
    %12 = vsyncpa [#allocation3], 0
    %13 = vsyncpa [#allocation5], 0
    // Predicated region
    $region2: #{prior_dirichlet_forward.1} parent=1 // pred_check
      _
    $region3: #{prior_dirichlet_forward.1} parent=1 // pred_check_branch
      %15 = sbr.rel (0) target = $region5
    $region4: #{prior_dirichlet_forward.1} parent=1 // pred_region
      %s17 = ssub.s32 128, 128
      %18 = vsyncadd [#allocation3], %s17
      %s20 = sshll.u32 [#allocation2], 4
      %s21 = int_to_ptr.vmem [resolvable:$true] %s20
      %23 = dma.hbm_to_vmem [thread:$0]  %s0, 128, %s21, [#allocation3]
    $region5: #{prior_dirichlet_forward.1} parent=1 // pred_fallthru
      _
    // Predicated region
    $region6: #{prior_dirichlet_forward.1} parent=1 // pred_check
      _
    $region7: #{prior_dirichlet_forward.1} parent=1 // pred_check_branch
      %25 = sbr.rel (0) target = $region9
    $region8: #{prior_dirichlet_forward.1} parent=1 // pred_region
      %s27 = ssub.s32 512, 512
      %28 = vsyncadd [#allocation5], %s27
      %s29 = sshll.u32 [#allocation4], 4
      %s30 = int_to_ptr.vmem [resolvable:$true] %s29
      %35 = dma.hbm_to_vmem [thread:$0]  %s1, 512, %s30, [#allocation5], 128, 128, 8
    $region9: #{prior_dirichlet_forward.1} parent=1 // pred_fallthru
      _
    // Predicated region
    $region10: #{prior_dirichlet_forward.1} parent=1 // pred_check
      _
    $region11: #{prior_dirichlet_forward.1} parent=1 // pred_check_branch
      %37 = sbr.rel (0) target = $region13
    $region12: #{prior_dirichlet_forward.1} parent=1 // pred_region
      _
    $region13: #{prior_dirichlet_forward.1} parent=1 // pred_fallthru
      _
    // Predicated region
    $region14: #{prior_dirichlet_forward.1} parent=1 // pred_check
      _
    $region15: #{prior_dirichlet_forward.1} parent=1 // pred_check_branch
      %39 = sbr.rel (0) target = $region17
    $region16: #{prior_dirichlet_forward.1} parent=1 // pred_region
      %s41 = ssub.s32 1024, 1024
      %42 = vsyncadd [#allocation5], %s41
      %s43 = sshll.u32 [#allocation6], 4
      %s44 = int_to_ptr.vmem [resolvable:$true] %s43
      %49 = dma.hbm_to_vmem [thread:$0]  %s3, 1024, %s44, [#allocation5], 128, 128, 8
    $region17: #{prior_dirichlet_forward.1} parent=1 // pred_fallthru
      _
    // Predicated region
    $region18: #{prior_dirichlet_forward.1} parent=1 // pred_check
      _
    $region19: #{prior_dirichlet_forward.1} parent=1 // pred_check_branch
      %51 = sbr.rel (0) target = $region21
    $region20: #{prior_dirichlet_forward.1} parent=1 // pred_region
      _
    $region21: #{prior_dirichlet_forward.1} parent=1 // pred_fallthru
      _
    // Predicated region
    $region22: #{prior_dirichlet_forward.1} parent=1 // pred_check
      _
    $region23: #{prior_dirichlet_forward.1} parent=1 // pred_check_branch
      %53 = sbr.rel (0) target = $region25
    $region24: #{prior_dirichlet_forward.1} parent=1 // pred_region
      %54 = dma.done [#allocation3], 128
    $region25: #{prior_dirichlet_forward.1} parent=1 // pred_fallthru
      _
    // Predicated region
    $region26: #{prior_dirichlet_forward.1} parent=1 // pred_check
      _
    $region27: #{prior_dirichlet_forward.1} parent=1 // pred_check_branch
      %56 = sbr.rel (0) target = $region29
    $region28: #{prior_dirichlet_forward.1} parent=1 // pred_region
      %57 = dma.done [#allocation5], 512
    $region29: #{prior_dirichlet_forward.1} parent=1 // pred_fallthru
      _
    // Predicated region
    $region30: #{prior_dirichlet_forward.1} parent=1 // pred_check
      _
    $region31: #{prior_dirichlet_forward.1} parent=1 // pred_check_branch
      %59 = sbr.rel (0) target = $region33
    $region32: #{prior_dirichlet_forward.1} parent=1 // pred_region
      %60 = dma.done [#allocation5], 1024
    $region33: #{prior_dirichlet_forward.1} parent=1 // pred_fallthru
      _
    %v61 = vld [vmem:[#allocation2] sm:$0xff]
    %v62 = vld [vmem:[#allocation4] sm:$0xff]
    %v63 = vld [vmem:[#allocation4 + $0x8] sm:$0xff]
    %v64 = vld [vmem:[#allocation4 + $0x10] sm:$0xff]
    %v65 = vld [vmem:[#allocation4 + $0x18] sm:$0xff]
    %v66 = vld [vmem:[%s2] sm:$0x1]
    %v68 = vlaneseq
    %v69 = vshrl.u32 %v68, 7
    %v70 = vsub.s32 0, %v69
    %v71 = vrot.slane %v66, %v70
    %vm73 = vcmask 261120
    %v75 = vsel %vm73, %v61, 0
    %77 = vmatprep.subr.mxu0 0.0
    %78 = vmatpush1.msra.mxu0 0.0
    %79 = vmatprep.subr.mxu0 0.0
    %80 = vmatpush1.msra.mxu0 0.0
    %81 = vmatprep.subr.mxu0 0.0
    %82 = vmatpush1.msra.mxu0 0.0
    %83 = vmatprep.subr.mxu0 0.0
    %84 = vmatpush1.msra.mxu0 0.0
    %85 = vmatprep.subr.mxu0 0.0
    %86 = vmatpush1.msra.mxu0 0.0
    %87 = vmatprep.subr.mxu0 0.0
    %88 = vmatpush1.msra.mxu0 0.0
    %89 = vmatprep.subr.mxu0 0.0
    %90 = vmatpush1.msra.mxu0 0.0
    %91 = vmatprep.subr.mxu0 0.0
    %92 = vmatpush1.msra.mxu0 0.0
    %93 = vmatprep.subr.mxu0 0.0
    %94 = vmatpush1.msra.mxu0 0.0
    %95 = vmatprep.subr.mxu0 0.0
    %96 = vmatpush1.msra.mxu0 0.0
    %97 = vmatprep.subr.mxu0 0.0
    %98 = vmatpush1.msra.mxu0 0.0
    %99 = vmatprep.subr.mxu0 0.0
    %100 = vmatpush1.msra.mxu0 0.0
    %101 = vmatprep.subr.mxu0 0.0
    %102 = vmatpush1.msra.mxu0 %v65
    %103 = vmatprep.subr.mxu0 0.0
    %104 = vmatpush1.msra.mxu0 %v64
    %105 = vmatprep.subr.mxu0 0.0
    %106 = vmatpush1.msra.mxu0 %v63
    %107 = vmatprep.subr.mxu0 0.0
    %108 = vmatpush1.msra.mxu0 %v62
    %109 = vmatprep.subr.mxu0 0.0
    %110 = vmatpush2.msra.mxu0 0.0
    %111 = vmatprep.subr.mxu0 0.0
    %112 = vmatpush2.msra.mxu0 0.0
    %113 = vmatprep.subr.mxu0 0.0
    %114 = vmatpush2.msra.mxu0 0.0
    %115 = vmatprep.subr.mxu0 0.0
    %116 = vmatpush2.msra.mxu0 0.0
    %117 = vmatprep.subr.mxu0 0.0
    %118 = vmatpush2.msra.mxu0 0.0
    %119 = vmatprep.subr.mxu0 0.0
    %120 = vmatpush2.msra.mxu0 0.0
    %121 = vmatprep.subr.mxu0 0.0
    %122 = vmatpush2.msra.mxu0 0.0
    %123 = vmatprep.subr.mxu0 0.0
    %124 = vmatpush2.msra.mxu0 0.0
    %125 = vmatprep.subr.mxu0 0.0
    %126 = vmatpush2.msra.mxu0 0.0
    %127 = vmatprep.subr.mxu0 0.0
    %128 = vmatpush2.msra.mxu0 0.0
    %129 = vmatprep.subr.mxu0 0.0
    %130 = vmatpush2.msra.mxu0 0.0
    %131 = vmatprep.subr.mxu0 0.0
    %132 = vmatpush2.msra.mxu0 0.0
    %133 = vmatprep.subr.mxu0 0.0
    %134 = vmatpush2.msra.mxu0 0.0
    %135 = vmatprep.subr.mxu0 0.0
    %136 = vmatpush2.msra.mxu0 0.0
    %137 = vmatprep.subr.mxu0 0.0
    %138 = vmatpush2.msra.mxu0 0.0
    %139 = vmatprep.subr.mxu0 0.0
    %140 = vmatpush2.msra.mxu0 0.0
    %141 = vmatprep.mubr.f32.mxu0 0.0
    %142 = vmatmul.mubr.f32.gmra.mxu0 %v75
    %v143 = vpop.f32.mrf.mxu0
    %v144 = vadd.f32 %v71, %v143
    %v145 = vpop.f32.mrf.mxu0
    %146 = vdwg.mxu0
    %v147 = vmax.f32 %v144, 0.0
    %v148 = vld [vmem:[#allocation6] sm:$0xff]
    %v149 = vld [vmem:[#allocation6 + $0x8] sm:$0xff]
    %v150 = vld [vmem:[#allocation6 + $0x10] sm:$0xff]
    %v151 = vld [vmem:[#allocation6 + $0x18] sm:$0xff]
    %v152 = vld [vmem:[#allocation6 + $0x20] sm:$0xff]
    %v153 = vld [vmem:[#allocation6 + $0x28] sm:$0xff]
    %v154 = vld [vmem:[#allocation6 + $0x30] sm:$0xff]
    %v155 = vld [vmem:[#allocation6 + $0x38] sm:$0xff]
    %v156 = vld [vmem:[%s4] sm:$0x1]
    %v158 = vlaneseq
    %v159 = vshrl.u32 %v158, 7
    %v160 = vsub.s32 0, %v159
    %v161 = vrot.slane %v156, %v160
    %vm163 = vcmask 523264
    %v165 = vsel %vm163, %v147, 0
    %167 = vmatprep.subr.mxu0 0.0
    %168 = vmatpush1.msra.mxu0 0.0
    %169 = vmatprep.subr.mxu0 0.0
    %170 = vmatpush1.msra.mxu0 0.0
    %171 = vmatprep.subr.mxu0 0.0
    %172 = vmatpush1.msra.mxu0 0.0
    %173 = vmatprep.subr.mxu0 0.0
    %174 = vmatpush1.msra.mxu0 0.0
    %175 = vmatprep.subr.mxu0 0.0
    %176 = vmatpush1.msra.mxu0 0.0
    %177 = vmatprep.subr.mxu0 0.0
    %178 = vmatpush1.msra.mxu0 0.0
    %179 = vmatprep.subr.mxu0 0.0
    %180 = vmatpush1.msra.mxu0 0.0
    %181 = vmatprep.subr.mxu0 0.0
    %182 = vmatpush1.msra.mxu0 0.0
    %183 = vmatprep.subr.mxu0 0.0
    %184 = vmatpush1.msra.mxu0 %v155
    %185 = vmatprep.subr.mxu0 0.0
    %186 = vmatpush1.msra.mxu0 %v154
    %187 = vmatprep.subr.mxu0 0.0
    %188 = vmatpush1.msra.mxu0 %v153
    %189 = vmatprep.subr.mxu0 0.0
    %190 = vmatpush1.msra.mxu0 %v152
    %191 = vmatprep.subr.mxu0 0.0
    %192 = vmatpush1.msra.mxu0 %v151
    %193 = vmatprep.subr.mxu0 0.0
    %194 = vmatpush1.msra.mxu0 %v150
    %195 = vmatprep.subr.mxu0 0.0
    %196 = vmatpush1.msra.mxu0 %v149
    %197 = vmatprep.subr.mxu0 0.0
    %198 = vmatpush1.msra.mxu0 %v148
    %199 = vmatprep.subr.mxu0 0.0
    %200 = vmatpush2.msra.mxu0 0.0
    %201 = vmatprep.subr.mxu0 0.0
    %202 = vmatpush2.msra.mxu0 0.0
    %203 = vmatprep.subr.mxu0 0.0
    %204 = vmatpush2.msra.mxu0 0.0
    %205 = vmatprep.subr.mxu0 0.0
    %206 = vmatpush2.msra.mxu0 0.0
    %207 = vmatprep.subr.mxu0 0.0
    %208 = vmatpush2.msra.mxu0 0.0
    %209 = vmatprep.subr.mxu0 0.0
    %210 = vmatpush2.msra.mxu0 0.0
    %211 = vmatprep.subr.mxu0 0.0
    %212 = vmatpush2.msra.mxu0 0.0
    %213 = vmatprep.subr.mxu0 0.0
    %214 = vmatpush2.msra.mxu0 0.0
    %215 = vmatprep.subr.mxu0 0.0
    %216 = vmatpush2.msra.mxu0 0.0
    %217 = vmatprep.subr.mxu0 0.0
    %218 = vmatpush2.msra.mxu0 0.0
    %219 = vmatprep.subr.mxu0 0.0
    %220 = vmatpush2.msra.mxu0 0.0
    %221 = vmatprep.subr.mxu0 0.0
    %222 = vmatpush2.msra.mxu0 0.0
    %223 = vmatprep.subr.mxu0 0.0
    %224 = vmatpush2.msra.mxu0 0.0
    %225 = vmatprep.subr.mxu0 0.0
    %226 = vmatpush2.msra.mxu0 0.0
    %227 = vmatprep.subr.mxu0 0.0
    %228 = vmatpush2.msra.mxu0 0.0
    %229 = vmatprep.subr.mxu0 0.0
    %230 = vmatpush2.msra.mxu0 0.0
    %231 = vmatprep.mubr.f32.mxu0 0.0
    %232 = vmatmul.mubr.f32.gmra.mxu0 %v165
    %v233 = vpop.f32.mrf.mxu0
    %v234 = vadd.f32 %v161, %v233
    %v235 = vpop.f32.mrf.mxu0
    %236 = vdwg.mxu0
    %v237 = vmul.f32 %v234, 1.442695
    %v238 = vpow.pop %v237
    %239 = vst [vmem:[%s5] sm:$0xff] %v238
    %240 = vadd.xlane.f32.xlu0 %v238
    %v241 = vpop.xlane.xlu0 %240
    %vm242 = vcmask 7168
    %243 = vst.msk [vmem:[%s6] sm:$0xff] %vm242, %v241
    // Predicated region
    $region34: #{prior_dirichlet_forward.1} parent=1 // pred_check
      _
    $region35: #{prior_dirichlet_forward.1} parent=1 // pred_check_branch
      %245 = sbr.rel (0) target = $region37
    $region36: #{prior_dirichlet_forward.1} parent=1 // pred_region
      _
    $region37: #{prior_dirichlet_forward.1} parent=1 // pred_fallthru
      _
    // Predicated region
    $region38: #{prior_dirichlet_forward.1} parent=1 // pred_check
      _
    $region39: #{prior_dirichlet_forward.1} parent=1 // pred_check_branch
      %247 = sbr.rel (0) target = $region41
    $region40: #{prior_dirichlet_forward.1} parent=1 // pred_region
      _
    $region41: #{prior_dirichlet_forward.1} parent=1 // pred_fallthru
      _
    // Predicated region
    $region42: #{prior_dirichlet_forward.1} parent=1 // pred_check
      _
    $region43: #{prior_dirichlet_forward.1} parent=1 // pred_check_branch
      %249 = sbr.rel (0) target = $region45
    $region44: #{prior_dirichlet_forward.1} parent=1 // pred_region
      _
    $region45: #{prior_dirichlet_forward.1} parent=1 // pred_fallthru
      _
    // Predicated region
    $region46: #{prior_dirichlet_forward.1} parent=1 // pred_check
      _
    $region47: #{prior_dirichlet_forward.1} parent=1 // pred_check_branch
      %251 = sbr.rel (0) target = $region49
    $region48: #{prior_dirichlet_forward.1} parent=1 // pred_region
      _
    $region49: #{prior_dirichlet_forward.1} parent=1 // pred_fallthru
      _
    %252 = vsyncpa [#allocation3], 1
    %253 = vsyncpa [#allocation5], 1

</llo_original>
